<compile_context>
chip_gen: v6e
topology: v6e:2x2x1
jax: 0.10.0
libtpu: 0.0.40
codegen_flags: <defaults>
</compile_context>

<pallas_src>
import functools

import numpy as np
import jax
import jax.numpy as jnp
from jax import lax
from jax.experimental import pallas as pl
from jax.experimental.pallas import tpu as pltpu


def _round_up(x, m):
    return ((x + m - 1) // m) * m


def _soft_kmeans_kernel(emb_ref, cent_t_ref, csq_ref, asg_ref, loss_ref,
                        *, beta, lmbda, K, N, tm):
    # emb_ref:    (tm, D_pad)     f32  embeddings tile (mean-centered, padded)
    # cent_t_ref: (D_pad, K_pad)  f32  centroids^T (resident across the grid)
    # csq_ref:    (1, K_pad)      f32  ||c||^2 per centroid (resident, hoisted)
    # asg_ref:    (tm, K_pad)     f32  cluster assignments (lane-dense store)
    # loss_ref:   (1, 8, 128)     f32  per-block partial of sum_i sum_k a*d
    e = emb_ref[...]
    c_t = cent_t_ref[...]
    c_sq = csq_ref[...]

    # squared distances: ||e||^2 - 2 e.c + ||c||^2   (cross term on the MXU)
    e_sq = jnp.sum(e * e, axis=1, keepdims=True)                      # (tm, 1)
    cross = jnp.dot(e, c_t, preferred_element_type=jnp.float32)       # (tm, K_pad)
    sq = jnp.maximum(e_sq - 2.0 * cross + c_sq, 0.0)

    d = lmbda * jnp.sqrt(sq)                                          # (tm, K_pad)

    # mask lane-padded (fake) clusters with -inf logits; stable softmax of -beta*d
    col = lax.broadcasted_iota(jnp.int32, d.shape, 1)
    z = jnp.where(col < K, -beta * d, -jnp.inf)
    z_max = jnp.max(z, axis=1, keepdims=True)
    p = jnp.exp(z - z_max)                     # padded lanes: exp(-inf) == 0
    denom = jnp.sum(p, axis=1, keepdims=True)  # (tm, 1)
    inv = pl.reciprocal(denom, approx=False)   # tiny (tm,1) reciprocal, not a (tm,K_pad) divide
    a = p * inv

    asg_ref[...] = a

    # per-block partial loss; padded rows (>= N) must not contribute
    row0 = pl.program_id(0) * tm
    row = lax.broadcasted_iota(jnp.int32, (tm, 1), 0)
    row_loss = jnp.sum(a * d, axis=1, keepdims=True)                  # (tm, 1)
    row_loss = jnp.where(row0 + row < N, row_loss, 0.0)
    block_loss = jnp.sum(row_loss)                                    # scalar
    loss_ref[...] = jnp.zeros(loss_ref.shape, jnp.float32) + block_loss


def soft_kmeans_criterion(embeddings, centroids, *, beta, lmbda):
    """embeddings: [N, D] f32, centroids: [K, D] f32 -> (loss scalar, assignments [N, K])."""
    embeddings = embeddings.astype(jnp.float32)
    centroids = centroids.astype(jnp.float32)
    N, D = embeddings.shape
    K, Dc = centroids.shape
    assert D == Dc, "embedding dim mismatch"

    # lane-pad cluster and feature dims
    D_pad = _round_up(D, 128)
    K_pad = _round_up(K, 128)

    # Row tile: as large as fits a ~16 MiB double-buffered emb+asg budget,
    # capped at 2048 rows; never larger than the (padded) batch; and capped at
    # ~N/2 when N is big enough so the "parallel" grid has >= 2 blocks (v7x megacore).
    bytes_per_row = 4 * (D_pad + K_pad)
    tm = (16 * 1024 * 1024) // (2 * bytes_per_row)
    tm = max(8, min(2048, (tm // 8) * 8))
    tm = min(tm, _round_up(N, 8))
    if N >= 16:
        tm = min(tm, max(8, _round_up(-(-N // 2), 8)))
    N_pad = _round_up(N, tm)
    n_blocks = N_pad // tm

    # Mean-center features (exactly distance-invariant) to reduce cancellation
    # in the expanded-form squared distance; centroid mean is cheap (K x D).
    mu = jnp.mean(centroids, axis=0, keepdims=True)
    cent_c = centroids - mu
    emb_p = jnp.zeros((N_pad, D_pad), jnp.float32).at[:N, :D].set(embeddings - mu)
    cent_t = jnp.zeros((D_pad, K_pad), jnp.float32).at[:D, :K].set(cent_c.T)
    c_sq = jnp.zeros((1, K_pad), jnp.float32).at[0, :K].set(jnp.sum(cent_c * cent_c, axis=1))

    kernel = functools.partial(
        _soft_kmeans_kernel,
        beta=float(beta), lmbda=float(lmbda), K=K, N=N, tm=tm,
    )

    # VMEM budget from the actual buffers (double-buffered), with slack,
    # clamped to stay safe on v7x's 64 MiB VMEM.
    footprint = 4 * (2 * tm * (D_pad + K_pad)   # emb + asg tiles, double-buffered
                     + 2 * D_pad * K_pad        # resident centroids (pipeline buffers)
                     + 2 * K_pad                # resident ||c||^2
                     + 2 * 8 * 128)             # per-block loss output
    vmem_limit = int(min(40 * 1024 * 1024, max(4 * 1024 * 1024, 2 * footprint)))

    cost = pl.CostEstimate(
        flops=2 * N_pad * K_pad * D_pad + 12 * N_pad * K_pad,
        transcendentals=2 * N_pad * K_pad,                     # sqrt + exp
        bytes_accessed=4 * (N_pad * D_pad + D_pad * K_pad + K_pad
                            + N_pad * K_pad + n_blocks * 8 * 128),
    )

    asg_pad, loss_parts = pl.pallas_call(
        kernel,
        out_shape=(
            jax.ShapeDtypeStruct((N_pad, K_pad), jnp.float32),
            jax.ShapeDtypeStruct((n_blocks, 8, 128), jnp.float32),
        ),
        grid_spec=pl.GridSpec(
            grid=(n_blocks,),
            in_specs=[
                pl.BlockSpec((tm, D_pad), lambda i: (i, 0)),       # embeddings tile
                pl.BlockSpec((D_pad, K_pad), lambda i: (0, 0)),    # centroids^T (resident)
                pl.BlockSpec((1, K_pad), lambda i: (0, 0)),        # ||c||^2 (resident)
            ],
            out_specs=[
                pl.BlockSpec((tm, K_pad), lambda i: (i, 0)),       # assignments tile
                pl.BlockSpec((1, 8, 128), lambda i: (i, 0, 0)),    # per-block loss partial
            ],
        ),
        compiler_params=pltpu.CompilerParams(
            dimension_semantics=("parallel",),                     # megacore-friendly
            vmem_limit_bytes=vmem_limit,
        ),
        cost_estimate=cost,
    )(emb_p, cent_t, c_sq)

    assignments = asg_pad[:N, :K]
    loss = jnp.sum(loss_parts[:, 0, 0]) / N
    # .detach() needs no analogue here: no autodiff graph is built in this forward pass.
    return loss, assignments


if __name__ == "__main__":
    beta, lmbda = 5.0, 0.7
    N, K, D = 8, 4, 32                      # small shapes: 8 embeddings, 4 clusters, dim 32

    key = jax.random.PRNGKey(0)
    ke, kc = jax.random.split(key)
    embeddings = jax.random.normal(ke, (N, D), jnp.float32)
    centroids = jax.random.normal(kc, (K, D), jnp.float32)

    loss, assignments = soft_kmeans_criterion(embeddings, centroids, beta=beta, lmbda=lmbda)
    loss = jax.block_until_ready(loss)
    assignments = jax.block_until_ready(assignments)

    # Pure-JAX reference mirroring the PyTorch module exactly.
    diff = embeddings[:, None, :] - centroids[None, :, :]
    d_ref = lmbda * jnp.sqrt(jnp.sum(diff ** 2, axis=2))
    logits = -beta * (d_ref - jnp.max(d_ref, axis=1, keepdims=True))
    a_ref = jax.nn.softmax(logits, axis=1)
    loss_ref = jnp.mean(jnp.sum(a_ref * d_ref, axis=1))

    np.testing.assert_allclose(np.asarray(assignments), np.asarray(a_ref), rtol=1e-4, atol=1e-5)
    np.testing.assert_allclose(np.asarray(loss), np.asarray(loss_ref), rtol=1e-4, atol=1e-5)

    print("KERNEL_OK")
</pallas_src>

<mosaic_0001>
module attributes {stable_mosaic.version = 11 : i64} {
  func.func @_soft_kmeans_kernel(%arg0: i32, %arg1: memref<8x128xf32, #tpu.memory_space<vmem>>, %arg2: memref<128x128xf32, #tpu.memory_space<vmem>>, %arg3: memref<1x128xf32, #tpu.memory_space<vmem>>, %arg4: memref<8x128xf32, #tpu.memory_space<vmem>>, %arg5: memref<1x8x128xf32, #tpu.memory_space<vmem>>) attributes {dimension_semantics = [#tpu.dimension_semantics<parallel>], iteration_bounds = array<i64: 1>, scalar_prefetch = 0 : i64, scratch_operands = 0 : i64, tpu.core_type = #tpu.core_type<tc>, window_params = [{transform_indices = @transform_0, window_bounds = array<i64: 8, 128>}, {pipeline_mode = #tpu.pipeline_mode<synchronous>, transform_indices = @transform_1, window_bounds = array<i64: 128, 128>}, {pipeline_mode = #tpu.pipeline_mode<synchronous>, transform_indices = @transform_2, window_bounds = array<i64: 1, 128>}, {transform_indices = @transform_3, window_bounds = array<i64: 8, 128>}, {transform_indices = @transform_4, window_bounds = array<i64: 1, 8, 128>}]} {
    %c0 = arith.constant 0 : index
    %c0_0 = arith.constant 0 : index
    %0 = vector.load %arg1[%c0, %c0_0] : memref<8x128xf32, #tpu.memory_space<vmem>>, vector<8x128xf32>
    %c0_1 = arith.constant 0 : index
    %c0_2 = arith.constant 0 : index
    %1 = vector.load %arg2[%c0_1, %c0_2] : memref<128x128xf32, #tpu.memory_space<vmem>>, vector<128x128xf32>
    %c0_3 = arith.constant 0 : index
    %c0_4 = arith.constant 0 : index
    %2 = vector.load %arg3[%c0_3, %c0_4] : memref<1x128xf32, #tpu.memory_space<vmem>>, vector<1x128xf32>
    %3 = arith.mulf %0, %0 : vector<8x128xf32>
    %cst = arith.constant dense<0.000000e+00> : vector<8xf32>
    %4 = vector.multi_reduction <add>, %3, %cst [1] : vector<8x128xf32> to vector<8xf32>
    %5 = vector.shape_cast %4 : vector<8xf32> to vector<8x1xf32>
    %cst_5 = arith.constant dense<0.000000e+00> : vector<8x128xf32>
    %6 = tpu.matmul %0, %1, %cst_5 {dimension_numbers = #tpu.dot_dimension_numbers<[1], [0], [0], [1], [0, 0, 1, 1], [], []>} : vector<8x128xf32>, vector<128x128xf32>, vector<8x128xf32> -> vector<8x128xf32>
    %cst_6 = arith.constant 2.000000e+00 : f32
    %7 = vector.broadcast %cst_6 : f32 to vector<8x128xf32>
    %8 = arith.mulf %7, %6 : vector<8x128xf32>
    %9 = vector.broadcast %5 : vector<8x1xf32> to vector<8x128xf32>
    %10 = arith.subf %9, %8 : vector<8x128xf32>
    %11 = vector.broadcast %2 : vector<1x128xf32> to vector<8x128xf32>
    %12 = arith.addf %10, %11 : vector<8x128xf32>
    %cst_7 = arith.constant 0.000000e+00 : f32
    %13 = vector.broadcast %cst_7 : f32 to vector<8x128xf32>
    %14 = arith.maximumf %12, %13 : vector<8x128xf32>
    %15 = math.sqrt %14 : vector<8x128xf32>
    %cst_8 = arith.constant 0.699999988 : f32
    %16 = vector.broadcast %cst_8 : f32 to vector<8x128xf32>
    %17 = arith.mulf %16, %15 : vector<8x128xf32>
    %18 = tpu.iota {dimensions = array<i32: 1>} : vector<8x128xi32>
    %c4_i32 = arith.constant 4 : i32
    %19 = vector.broadcast %c4_i32 : i32 to vector<8x128xi32>
    %20 = arith.cmpi slt, %18, %19 : vector<8x128xi32>
    %cst_9 = arith.constant -5.000000e+00 : f32
    %21 = vector.broadcast %cst_9 : f32 to vector<8x128xf32>
    %22 = arith.mulf %21, %17 : vector<8x128xf32>
    %cst_10 = arith.constant 0xFF800000 : f32
    %23 = vector.broadcast %cst_10 : f32 to vector<8x128xf32>
    %24 = arith.select %20, %22, %23 : vector<8x128xi1>, vector<8x128xf32>
    %cst_11 = arith.constant dense<0xFF800000> : vector<8xf32>
    %25 = vector.multi_reduction <maximumf>, %24, %cst_11 [1] : vector<8x128xf32> to vector<8xf32>
    %26 = vector.shape_cast %25 : vector<8xf32> to vector<8x1xf32>
    %27 = vector.broadcast %26 : vector<8x1xf32> to vector<8x128xf32>
    %28 = arith.subf %24, %27 : vector<8x128xf32>
    %29 = math.exp %28 : vector<8x128xf32>
    %cst_12 = arith.constant dense<0.000000e+00> : vector<8xf32>
    %30 = vector.multi_reduction <add>, %29, %cst_12 [1] : vector<8x128xf32> to vector<8xf32>
    %31 = vector.shape_cast %30 : vector<8xf32> to vector<8x1xf32>
    %32 = tpu.reciprocal %31 : vector<8x1xf32> -> vector<8x1xf32>
    %33 = vector.broadcast %32 : vector<8x1xf32> to vector<8x128xf32>
    %34 = arith.mulf %29, %33 : vector<8x128xf32>
    %c0_13 = arith.constant 0 : index
    %c0_14 = arith.constant 0 : index
    %35 = vector.load %arg4[%c0_13, %c0_14] : memref<8x128xf32, #tpu.memory_space<vmem>>, vector<8x128xf32>
    tpu.vector_store %arg4[%c0_13, %c0_14], %34 {strides = array<i32>} : memref<8x128xf32, #tpu.memory_space<vmem>>, vector<8x128xf32>,
    %c8_i32 = arith.constant 8 : i32
    %36 = arith.muli %arg0, %c8_i32 : i32
    %37 = tpu.iota {dimensions = array<i32: 0>} : vector<8x1xi32>
    %38 = arith.mulf %34, %17 : vector<8x128xf32>
    %cst_15 = arith.constant dense<0.000000e+00> : vector<8xf32>
    %39 = vector.multi_reduction <add>, %38, %cst_15 [1] : vector<8x128xf32> to vector<8xf32>
    %40 = vector.shape_cast %39 : vector<8xf32> to vector<8x1xf32>
    %41 = vector.broadcast %36 : i32 to vector<8x1xi32>
    %42 = arith.addi %41, %37 : vector<8x1xi32>
    %c8_i32_16 = arith.constant 8 : i32
    %43 = vector.broadcast %c8_i32_16 : i32 to vector<8x1xi32>
    %44 = arith.cmpi slt, %42, %43 : vector<8x1xi32>
    %cst_17 = arith.constant 0.000000e+00 : f32
    %45 = vector.broadcast %cst_17 : f32 to vector<8x1xf32>
    %46 = arith.select %44, %40, %45 : vector<8x1xi1>, vector<8x1xf32>
    %47 = vector.shape_cast %46 : vector<8x1xf32> to vector<1x8x1xf32>
    %cst_18 = arith.constant dense<0.000000e+00> : vector<1xf32>
    %48 = vector.multi_reduction <add>, %47, %cst_18 [1, 2] : vector<1x8x1xf32> to vector<1xf32>
    %49 = vector.shape_cast %48 : vector<1xf32> to vector<1x1x1xf32>
    %50 = vector.extract %49[0, 0, 0] : f32 from vector<1x1x1xf32>
    %cst_19 = arith.constant 0.000000e+00 : f32
    %51 = vector.broadcast %cst_19 : f32 to vector<1x8x128xf32>
    %52 = vector.broadcast %50 : f32 to vector<1x8x128xf32>
    %53 = arith.addf %51, %52 : vector<1x8x128xf32>
    %c0_20 = arith.constant 0 : index
    %c0_21 = arith.constant 0 : index
    %c0_22 = arith.constant 0 : index
    %54 = vector.load %arg5[%c0_20, %c0_21, %c0_22] : memref<1x8x128xf32, #tpu.memory_space<vmem>>, vector<1x8x128xf32>
    tpu.vector_store %arg5[%c0_20, %c0_21, %c0_22], %53 {strides = array<i32>} : memref<1x8x128xf32, #tpu.memory_space<vmem>>, vector<1x8x128xf32>,
    return
  }
  func.func @transform_0(%arg0: i32) -> (i32, i32) {
    %c0_i32 = arith.constant 0 : i32
    %c0_i32_0 = arith.constant 0 : i32
    return %arg0, %c0_i32 : i32, i32
  }
  func.func @transform_1(%arg0: i32) -> (i32, i32) {
    %c0_i32 = arith.constant 0 : i32
    %c0_i32_0 = arith.constant 0 : i32
    %c0_i32_1 = arith.constant 0 : i32
    return %c0_i32, %c0_i32_0 : i32, i32
  }
  func.func @transform_2(%arg0: i32) -> (i32, i32) {
    %c0_i32 = arith.constant 0 : i32
    %c0_i32_0 = arith.constant 0 : i32
    %c0_i32_1 = arith.constant 0 : i32
    return %c0_i32, %c0_i32_0 : i32, i32
  }
  func.func @transform_3(%arg0: i32) -> (i32, i32) {
    %c0_i32 = arith.constant 0 : i32
    %c0_i32_0 = arith.constant 0 : i32
    return %arg0, %c0_i32 : i32, i32
  }
  func.func @transform_4(%arg0: i32) -> (i32, i32, i32) {
    %c0_i32 = arith.constant 0 : i32
    %c0_i32_0 = arith.constant 0 : i32
    %c0_i32_1 = arith.constant 0 : i32
    return %arg0, %c0_i32, %c0_i32_0 : i32, i32, i32
  }
}

</mosaic_0001>

<llo_original>
// kernel: tpu_custom_call.1
$region0: #{tpu_custom_call.1}
  #allocation0 [shape = 'u32[]', space=smem, size = 0x4, offset = 0x4, fixed_abs, tag = 'smem constant byte address 0x4 - core index']
  #allocation1 [shape = 'u32[144,128]{1,0:T(1,128)}', space=vmem, size = 0x12000, scoped, tag = 'internal scratch']
  %s0 = inlined_call_operand.hbm [shape: f32[8,128], index: 0, kind: input, shape index: {}]
  %s1 = inlined_call_operand.hbm [shape: f32[128,128], index: 1, kind: input, shape index: {}]
  %s2 = inlined_call_operand.vmem [shape: f32[1,128], index: 2, kind: input, shape index: {}]
  %s3 = inlined_call_operand.hbm [shape: f32[8,128], index: 3, kind: output, shape index: {0}]
  %s4 = inlined_call_operand.hbm [shape: f32[1,8,128], index: 4, kind: output, shape index: {1}]
  %5 = xla_tuple %s3, %s4
  %s6 = sld [smem:[#allocation0]]
  $region38: #{tpu_custom_call.1} parent=0
    _
  %s8 = ssub.s32 1, %s6
  %s9 = scalar_select 0, %s8, %s6
  $region1: #{tpu_custom_call.1} parent=0
    #allocation2 [shape = 'u8[4096]{0}', space=vmem, size = 0x1000, scoped, tag = 'input window, operand 0, single buffered']
    #allocation3 [shape = 's32[1]{0}', space=sflag, size = 0x4, scoped, tag = 'scoped memory for tpu_custom_call.1']
    #allocation4 [shape = 's32[1]{0}', space=sflag, size = 0x4, scoped, tag = 'scoped memory for tpu_custom_call.1']
    #allocation5 [shape = 'u8[65536]{0}', space=vmem, size = 0x10000, scoped, tag = 'input window, operand 1, single buffered']
    #allocation6 [shape = 's32[1]{0}', space=sflag, size = 0x4, scoped, tag = 'scoped memory for tpu_custom_call.1']
    #allocation7 [shape = 'u8[4096]{0}', space=vmem, size = 0x1000, scoped, tag = 'output window, operand 0, single buffered']
    #allocation8 [shape = 'u8[4096]{0}', space=vmem, size = 0x1000, scoped, tag = 'output window, operand 1, single buffered']
    #allocation9 [shape = 's32[1]{0}', space=sflag, size = 0x4, scoped, tag = 'scoped memory for tpu_custom_call.1']
    %10 = vsyncpa [#allocation3], 0
    %11 = vsyncpa [#allocation6], 0
    %12 = vsyncpa [#allocation4], 0
    %13 = vsyncpa [#allocation9], 0
    // Predicated region
    $region2: #{tpu_custom_call.1} parent=1 // pred_check
      _
    $region3: #{tpu_custom_call.1} parent=1 // pred_check_branch
      %15 = sbr.rel (0) target = $region5
    $region4: #{tpu_custom_call.1} parent=1 // pred_region
      %s17 = ssub.s32 128, 128
      %18 = vsyncadd [#allocation3], %s17
      %s20 = sshll.u32 [#allocation2], 4
      %s21 = int_to_ptr.vmem [resolvable:$true] %s20
      %23 = dma.hbm_to_vmem [thread:$0]  %s0, 128, %s21, [#allocation3]
    $region5: #{tpu_custom_call.1} parent=1 // pred_fallthru
      _
    // Predicated region
    $region6: #{tpu_custom_call.1} parent=1 // pred_check
      _
    $region7: #{tpu_custom_call.1} parent=1 // pred_check_branch
      %25 = sbr.rel (0) target = $region9
    $region8: #{tpu_custom_call.1} parent=1 // pred_region
      %s27 = ssub.s32 2048, 2048
      %28 = vsyncadd [#allocation6], %s27
      %s29 = sshll.u32 [#allocation5], 4
      %s30 = int_to_ptr.vmem [resolvable:$true] %s29
      %35 = dma.hbm_to_vmem [thread:$0]  %s1, 2048, %s30, [#allocation6], 128, 128, 8
    $region9: #{tpu_custom_call.1} parent=1 // pred_fallthru
      _
    // Predicated region
    $region10: #{tpu_custom_call.1} parent=1 // pred_check
      _
    $region11: #{tpu_custom_call.1} parent=1 // pred_check_branch
      %37 = sbr.rel (0) target = $region13
    $region12: #{tpu_custom_call.1} parent=1 // pred_region
      _
    $region13: #{tpu_custom_call.1} parent=1 // pred_fallthru
      _
    // Predicated region
    $region14: #{tpu_custom_call.1} parent=1 // pred_check
      _
    $region15: #{tpu_custom_call.1} parent=1 // pred_check_branch
      %39 = sbr.rel (0) target = $region17
    $region16: #{tpu_custom_call.1} parent=1 // pred_region
      %40 = dma.done [#allocation3], 128
    $region17: #{tpu_custom_call.1} parent=1 // pred_fallthru
      _
    // Predicated region
    $region18: #{tpu_custom_call.1} parent=1 // pred_check
      _
    $region19: #{tpu_custom_call.1} parent=1 // pred_check_branch
      %42 = sbr.rel (0) target = $region21
    $region20: #{tpu_custom_call.1} parent=1 // pred_region
      %43 = dma.done [#allocation6], 2048
    $region21: #{tpu_custom_call.1} parent=1 // pred_fallthru
      _
    %v44 = vld [vmem:[#allocation2] sm:$0xff]
    %v45 = vld [vmem:[#allocation5] sm:$0xff]
    %v46 = vld [vmem:[#allocation5 + $0x8] sm:$0xff]
    %v47 = vld [vmem:[#allocation5 + $0x10] sm:$0xff]
    %v48 = vld [vmem:[#allocation5 + $0x18] sm:$0xff]
    %v49 = vld [vmem:[#allocation5 + $0x20] sm:$0xff]
    %v50 = vld [vmem:[#allocation5 + $0x28] sm:$0xff]
    %v51 = vld [vmem:[#allocation5 + $0x30] sm:$0xff]
    %v52 = vld [vmem:[#allocation5 + $0x38] sm:$0xff]
    %v53 = vld [vmem:[#allocation5 + $0x40] sm:$0xff]
    %v54 = vld [vmem:[#allocation5 + $0x48] sm:$0xff]
    %v55 = vld [vmem:[#allocation5 + $0x50] sm:$0xff]
    %v56 = vld [vmem:[#allocation5 + $0x58] sm:$0xff]
    %v57 = vld [vmem:[#allocation5 + $0x60] sm:$0xff]
    %v58 = vld [vmem:[#allocation5 + $0x68] sm:$0xff]
    %v59 = vld [vmem:[#allocation5 + $0x70] sm:$0xff]
    %v60 = vld [vmem:[#allocation5 + $0x78] sm:$0xff]
    %v61 = vld [vmem:[%s2] sm:$0x1]
    %v62 = vmul.f32 %v44, %v44
    %63 = vadd.xlane.f32.xlu0 %v62
    %v64 = vpop.xlane.xlu0 %63
    %65 = vmatprep.subr.mxu0 0.0
    %66 = vmatpush1.msra.mxu0 %v60
    %67 = vmatprep.subr.mxu0 0.0
    %68 = vmatpush1.msra.mxu0 %v59
    %69 = vmatprep.subr.mxu0 0.0
    %70 = vmatpush1.msra.mxu0 %v58
    %71 = vmatprep.subr.mxu0 0.0
    %72 = vmatpush1.msra.mxu0 %v57
    %73 = vmatprep.subr.mxu0 0.0
    %74 = vmatpush1.msra.mxu0 %v56
    %75 = vmatprep.subr.mxu0 0.0
    %76 = vmatpush1.msra.mxu0 %v55
    %77 = vmatprep.subr.mxu0 0.0
    %78 = vmatpush1.msra.mxu0 %v54
    %79 = vmatprep.subr.mxu0 0.0
    %80 = vmatpush1.msra.mxu0 %v53
    %81 = vmatprep.subr.mxu0 0.0
    %82 = vmatpush1.msra.mxu0 %v52
    %83 = vmatprep.subr.mxu0 0.0
    %84 = vmatpush1.msra.mxu0 %v51
    %85 = vmatprep.subr.mxu0 0.0
    %86 = vmatpush1.msra.mxu0 %v50
    %87 = vmatprep.subr.mxu0 0.0
    %88 = vmatpush1.msra.mxu0 %v49
    %89 = vmatprep.subr.mxu0 0.0
    %90 = vmatpush1.msra.mxu0 %v48
    %91 = vmatprep.subr.mxu0 0.0
    %92 = vmatpush1.msra.mxu0 %v47
    %93 = vmatprep.subr.mxu0 0.0
    %94 = vmatpush1.msra.mxu0 %v46
    %95 = vmatprep.subr.mxu0 0.0
    %96 = vmatpush1.msra.mxu0 %v45
    %97 = vmatprep.subr.mxu0 0.0
    %98 = vmatpush2.msra.mxu0 0.0
    %99 = vmatprep.subr.mxu0 0.0
    %100 = vmatpush2.msra.mxu0 0.0
    %101 = vmatprep.subr.mxu0 0.0
    %102 = vmatpush2.msra.mxu0 0.0
    %103 = vmatprep.subr.mxu0 0.0
    %104 = vmatpush2.msra.mxu0 0.0
    %105 = vmatprep.subr.mxu0 0.0
    %106 = vmatpush2.msra.mxu0 0.0
    %107 = vmatprep.subr.mxu0 0.0
    %108 = vmatpush2.msra.mxu0 0.0
    %109 = vmatprep.subr.mxu0 0.0
    %110 = vmatpush2.msra.mxu0 0.0
    %111 = vmatprep.subr.mxu0 0.0
    %112 = vmatpush2.msra.mxu0 0.0
    %113 = vmatprep.subr.mxu0 0.0
    %114 = vmatpush2.msra.mxu0 0.0
    %115 = vmatprep.subr.mxu0 0.0
    %116 = vmatpush2.msra.mxu0 0.0
    %117 = vmatprep.subr.mxu0 0.0
    %118 = vmatpush2.msra.mxu0 0.0
    %119 = vmatprep.subr.mxu0 0.0
    %120 = vmatpush2.msra.mxu0 0.0
    %121 = vmatprep.subr.mxu0 0.0
    %122 = vmatpush2.msra.mxu0 0.0
    %123 = vmatprep.subr.mxu0 0.0
    %124 = vmatpush2.msra.mxu0 0.0
    %125 = vmatprep.subr.mxu0 0.0
    %126 = vmatpush2.msra.mxu0 0.0
    %127 = vmatprep.subr.mxu0 0.0
    %128 = vmatpush2.msra.mxu0 0.0
    %129 = vmatprep.mubr.f32.mxu0 0.0
    %130 = vmatmul.mubr.f32.gmra.mxu0 %v44
    %v131 = vpop.f32.mrf.mxu0
    %v132 = vadd.f32 0.0, %v131
    %v133 = vpop.f32.mrf.mxu0
    %134 = vdwg.mxu0
    %v135 = vmul.f32 %v132, 2.0
    %v136 = vsub.f32 %v64, %v135
    %v138 = vlaneseq
    %v139 = vshrl.u32 %v138, 7
    %v140 = vsub.s32 0, %v139
    %v141 = vrot.slane %v61, %v140
    %v143 = vadd.f32 %v136, %v141
    %v144 = vmax.f32 %v143, 0.0
    %v145 = vrsqrt.pop %v144
    %v146 = vmul.f32 %v144, %v145
    %vm147 = vcmp.eq.f32.partialorder %v144, inf
    %v148 = vsel %vm147, %v144, %v146
    %vm149 = vcmp.eq.f32.partialorder %v144, 0.0
    %v150 = vand.u32 %v144, 2147483648
    %v151 = vsel %vm149, %v150, %v148
    %v152 = vmul.f32 %v151, 0.7
    %v153 = vlaneseq
    %v154 = vand.u32 %v153, 127
    %vm155 = vcmp.lt.s32.totalorder %v154, 4
    %v156 = vmul.f32 %v152, -5.0
    %v157 = vsel %vm155, %v156, -inf
    %158 = vmax.xlane.f32.xlu0 %v157
    %v159 = vpop.xlane.xlu0 %158
    %v160 = vsub.f32 %v157, %v159
    %v161 = vmul.f32 %v160, 1.442695
    %v162 = vpow.pop %v161
    %163 = vadd.xlane.f32.xlu0 %v162
    %v164 = vpop.xlane.xlu0 %163
    %v165 = vrcp.pop %v164
    %v166 = vmul.f32 %v162, %v165
    %167 = vst [vmem:[#allocation7] sm:$0xff] %v166
    %s168 = smul.u32 0, 8
    %v169 = vlaneseq
    %v170 = vshrl.u32 %v169, 7
    %v171 = vmul.f32 %v166, %v152
    %172 = vadd.xlane.f32.xlu0 %v171
    %v173 = vpop.xlane.xlu0 %172
    %v174 = vstv %s168
    %v175 = vadd.s32 %v174, %v170
    %vm176 = vcmp.lt.s32.totalorder %v175, 8
    %v177 = vsel %vm176, %v173, 0.0
    %vm178 = vcmask 7168
    %v179 = vsel %vm178, %v177, 0.0
    %180 = vadd.xlane.f32.xlu0 %v179
    %v181 = vpop.xlane.xlu0 %180
    %v182 = vrot.slane %v181, 4
    %v183 = vadd.f32 %v181, %v182
    %v184 = vrot.slane %v183, 2
    %v185 = vadd.f32 %v183, %v184
    %v186 = vrot.slane %v185, 1
    %v187 = vadd.f32 %v185, %v186
    %s188 = vtos %v187
    %v189 = vstv %s188
    %v190 = vadd.f32 %v189, 0.0
    %191 = vst [vmem:[#allocation8] sm:$0xff] %v190
    // Predicated region
    $region22: #{tpu_custom_call.1} parent=1 // pred_check
      _
    $region23: #{tpu_custom_call.1} parent=1 // pred_check_branch
      %193 = sbr.rel (0) target = $region25
    $region24: #{tpu_custom_call.1} parent=1 // pred_region
      %s195 = ssub.s32 128, 128
      %196 = vsyncadd [#allocation4], %s195
      %s198 = sshll.u32 [#allocation7], 4
      %s199 = int_to_ptr.vmem [resolvable:$true] %s198
      %201 = dma.vmem_to_hbm [thread:$0]  %s199, 128, %s3, [#allocation4]
    $region25: #{tpu_custom_call.1} parent=1 // pred_fallthru
      _
    // Predicated region
    $region26: #{tpu_custom_call.1} parent=1 // pred_check
      _
    $region27: #{tpu_custom_call.1} parent=1 // pred_check_branch
      %203 = sbr.rel (0) target = $region29
    $region28: #{tpu_custom_call.1} parent=1 // pred_region
      %s205 = ssub.s32 128, 128
      %206 = vsyncadd [#allocation9], %s205
      %s208 = sshll.u32 [#allocation8], 4
      %s209 = int_to_ptr.vmem [resolvable:$true] %s208
      %211 = dma.vmem_to_hbm [thread:$0]  %s209, 128, %s4, [#allocation9]
    $region29: #{tpu_custom_call.1} parent=1 // pred_fallthru
      _
    // Predicated region
    $region30: #{tpu_custom_call.1} parent=1 // pred_check
      _
    $region31: #{tpu_custom_call.1} parent=1 // pred_check_branch
      %213 = sbr.rel (0) target = $region33
    $region32: #{tpu_custom_call.1} parent=1 // pred_region
      %214 = dma.done [#allocation4], 128
    $region33: #{tpu_custom_call.1} parent=1 // pred_fallthru
      _
    // Predicated region
    $region34: #{tpu_custom_call.1} parent=1 // pred_check
      _
    $region35: #{tpu_custom_call.1} parent=1 // pred_check_branch
      %216 = sbr.rel (0) target = $region37
    $region36: #{tpu_custom_call.1} parent=1 // pred_region
      %217 = dma.done [#allocation9], 128
    $region37: #{tpu_custom_call.1} parent=1 // pred_fallthru
      _
    %218 = vsyncpa [#allocation3], 1
    %219 = vsyncpa [#allocation6], 1
    %220 = vsyncpa [#allocation4], 1
    %221 = vsyncpa [#allocation9], 1

</llo_original>
